<compile_context>
chip_gen: v5e
topology: v5e:2x2
jax: 0.10.0
libtpu: 0.0.40
codegen_flags: <defaults>
</compile_context>

<pallas_src>
import functools
import numpy as np
import jax
import jax.numpy as jnp
from jax.experimental import pallas as pl
from jax.experimental.pallas import tpu as pltpu

_PACK = 128  # lane-dense packed input/output width


def actor_kernel(obs_ref, gn_ref,
                 cw_ref, cb_ref, ew_ref, eb_ref,
                 w1a_ref, w1b_ref, b1_ref,
                 w2_ref, b2_ref,
                 w3mu_ref, w3ls_ref, b3mu_ref, b3ls_ref,
                 out_ref,
                 *, log_std_min, log_std_max, action_dim, goal_dim):
    A = action_dim
    G = goal_dim

    # --- conv head: AdaptiveMaxPool2d(1) + Flatten + Linear(128,50) + Tanh ---
    # obs block is [TB, 128, HW] (native NCHW, no wrapper transpose); the
    # global max pool is a lane-axis (HW) reduction done in the obs dtype
    # (max is exact in bf16); only the small pooled result is cast to f32.
    pooled = jnp.max(obs_ref[...], axis=-1).astype(jnp.float32)              # [TB, 128]
    conv_out = jnp.tanh(
        jnp.dot(pooled, cw_ref[...], preferred_element_type=jnp.float32)
        + cb_ref[...])                                                       # [TB, 50]

    # --- goal / noise arrive in one lane-dense packed slab [TB, 128] ---
    goal = gn_ref[:, 0:G]                                                    # [TB, G]
    noise = gn_ref[:, G:G + A]                                               # [TB, A]

    # --- goal embedding: Linear(goal_dim, 50) ---
    goal_emb = (jnp.dot(goal, ew_ref[...],
                        preferred_element_type=jnp.float32) + eb_ref[...])   # [TB, 50]

    # --- trunk layer 1 on cat([conv_out, goal_emb], 1), expressed as a split
    #     matmul (avoids an in-kernel concatenate, identical math) ---
    h = (jnp.dot(conv_out, w1a_ref[...], preferred_element_type=jnp.float32)
         + jnp.dot(goal_emb, w1b_ref[...], preferred_element_type=jnp.float32)
         + b1_ref[...])
    h = jnp.maximum(h, 0.0)
    h = jnp.maximum(
        jnp.dot(h, w2_ref[...], preferred_element_type=jnp.float32) + b2_ref[...], 0.0)

    # --- final layer: w3 split into mu / log_std halves (no lane slicing) ---
    mu = jnp.dot(h, w3mu_ref[...], preferred_element_type=jnp.float32) + b3mu_ref[...]
    log_std = jnp.tanh(
        jnp.dot(h, w3ls_ref[...], preferred_element_type=jnp.float32) + b3ls_ref[...])
    log_std = log_std_min + 0.5 * (log_std_max - log_std_min) * (log_std + 1.0)
    std = jnp.exp(log_std)

    # --- reparameterized sample + gaussian log-prob ---
    pi = mu + noise * std
    log_pi = (jnp.sum(-0.5 * noise * noise - log_std, axis=-1, keepdims=True)
              - 0.5 * np.log(2.0 * np.pi) * A)

    # --- squash() ---
    mu_t = jnp.tanh(mu)
    pi_t = jnp.tanh(pi)
    log_pi = log_pi - jnp.sum(
        jnp.log(jnp.maximum(1.0 - pi_t * pi_t, 0.0) + 1e-6),
        axis=-1, keepdims=True)

    # --- lane-dense packed output: [mu | pi | log_std | log_pi | pad].
    # Pad lanes are never read by the wrapper, so no zero-init full store.
    out_ref[:, 0:A] = mu_t
    out_ref[:, A:2 * A] = pi_t
    out_ref[:, 2 * A:3 * A] = log_std
    out_ref[:, 3 * A:3 * A + 1] = log_pi


def _round_up(x, m):
    return ((x + m - 1) // m) * m


def _vmem_budget():
    """Returns (target obs-block bytes, vmem_limit cap) per TPU generation."""
    try:
        cap = int(getattr(pltpu.get_tpu_info(), "vmem_capacity_bytes", 0) or 0)
    except Exception:
        cap = 0
    if cap >= (96 << 20):          # v5e / v6e: 128 MiB physical VMEM
        return 24 << 20, 96 << 20
    # v7x (64 MiB per TensorCore) or unknown -> conservative settings.
    return 10 << 20, 48 << 20


def _pick_batch_tile(B, row_vmem_bytes, target_block_bytes):
    """Batch tile: largest multiple of 8 whose (lane-padded) obs block stays
    under target_block_bytes, clamped so there are >= 2 grid steps whenever B
    allows it (keeps both v7x TensorCores busy, overlaps DMA with compute)."""
    tb = target_block_bytes // max(1, row_vmem_bytes)
    tb = max(8, (tb // 8) * 8)
    if B >= 16:
        tb = min(tb, _round_up(-(-B // 2), 8))
    return B if B <= tb else tb


def actor_forward(obs_nchw, goal, noise, params, *, log_std_min, log_std_max,
                  obs_dtype=jnp.bfloat16):
    """obs_nchw: [B, 128, H, W], goal: [B, goal_dim], noise: [B, action_dim].

    params = (cw, cb, ew, eb, w1a, w1b, b1, w2, b2, w3, b3) with [in, out]
    weight layout.  obs is consumed in its native NCHW layout (no transpose);
    bf16 obs is the default for halved HBM traffic.  For best results the
    producer should emit bf16 obs directly so the cast below is a no-op.
    """
    B, C, H, W = obs_nchw.shape
    HW = H * W
    A = noise.shape[-1]
    goal_dim = goal.shape[-1]
    assert goal_dim + A <= _PACK and 3 * A + 1 <= _PACK

    # [B, C, H, W] -> [B, C, HW] is a free reshape (no copy, no transpose).
    obs = obs_nchw.reshape(B, C, HW)
    if obs_dtype is not None and obs.dtype != obs_dtype:
        obs = obs.astype(obs_dtype)  # ideally already done at the producer

    # Lane-dense packed per-row inputs: [goal | noise | 0-pad] -> 1 dense DMA.
    gn = jnp.concatenate(
        [goal.astype(jnp.float32), noise.astype(jnp.float32),
         jnp.zeros((B, _PACK - goal_dim - A), jnp.float32)], axis=1)

    (cw, cb, ew, eb, w1a, w1b, b1, w2, b2, w3, b3) = params
    w3_mu, w3_ls = w3[:, :A], w3[:, A:]
    b3_mu, b3_ls = b3[:, :A], b3[:, A:]
    weights = (cw, cb, ew, eb, w1a, w1b, b1, w2, b2, w3_mu, w3_ls, b3_mu, b3_ls)

    feat = cw.shape[1]
    hidden = w2.shape[0]

    target_block, vmem_cap = _vmem_budget()
    row_vmem = C * _round_up(HW, 128) * obs.dtype.itemsize   # HW lane-padded in VMEM
    TB = _pick_batch_tile(B, row_vmem, target_block)
    grid = (pl.cdiv(B, TB),)

    # Batch-tiled specs for per-row tensors; constant index_map for weights so
    # they are fetched once and stay VMEM-resident across grid iterations.
    obs_spec = pl.BlockSpec((TB, C, HW), lambda i: (i, 0, 0))
    gn_spec = pl.BlockSpec((TB, _PACK), lambda i: (i, 0))
    weight_specs = [pl.BlockSpec(w.shape, lambda i: (0, 0)) for w in weights]
    out_spec = pl.BlockSpec((TB, _PACK), lambda i: (i, 0))

    obs_block_vmem = TB * row_vmem
    vmem_limit = int(min(vmem_cap, max(32 << 20, 3 * obs_block_vmem + (12 << 20))))

    param_bytes = sum(int(np.prod(w.shape)) * w.dtype.itemsize for w in weights)
    cost = pl.CostEstimate(
        flops=int(2 * B * (C * feat + goal_dim * feat + 2 * feat * hidden
                           + hidden * hidden + hidden * 2 * A)),
        transcendentals=int(B * (feat + 5 * A)),
        bytes_accessed=int(obs.size * obs.dtype.itemsize
                           + gn.size * gn.dtype.itemsize
                           + param_bytes + B * _PACK * 4),
    )

    kern = functools.partial(actor_kernel,
                             log_std_min=float(log_std_min),
                             log_std_max=float(log_std_max),
                             action_dim=A, goal_dim=goal_dim)

    packed = pl.pallas_call(
        kern,
        grid=grid,
        in_specs=[obs_spec, gn_spec] + weight_specs,
        out_specs=out_spec,
        out_shape=jax.ShapeDtypeStruct((B, _PACK), jnp.float32),
        compiler_params=pltpu.CompilerParams(
            dimension_semantics=("parallel",),   # megacore sharding on v7x
            vmem_limit_bytes=vmem_limit),
        cost_estimate=cost,
    )(obs, gn, *weights)

    mu = packed[:, 0:A]
    pi = packed[:, A:2 * A]
    log_std = packed[:, 2 * A:3 * A]
    log_pi = packed[:, 3 * A:3 * A + 1]
    return mu, pi, log_pi, log_std


def actor_forward_ref(obs_nchw, goal, noise, params, *, log_std_min, log_std_max):
    """Pure-JAX reference (same math) for a correctness check."""
    (cw, cb, ew, eb, w1a, w1b, b1, w2, b2, w3, b3) = params
    B, C, H, W = obs_nchw.shape
    A = noise.shape[-1]
    pooled = jnp.max(obs_nchw.reshape(B, C, H * W), axis=-1)
    conv_out = jnp.tanh(pooled @ cw + cb)
    goal_emb = goal @ ew + eb
    h = jnp.maximum(conv_out @ w1a + goal_emb @ w1b + b1, 0.0)
    h = jnp.maximum(h @ w2 + b2, 0.0)
    out = h @ w3 + b3
    mu = out[:, :A]
    log_std = jnp.tanh(out[:, A:])
    log_std = log_std_min + 0.5 * (log_std_max - log_std_min) * (log_std + 1.0)
    std = jnp.exp(log_std)
    pi = mu + noise * std
    log_pi = (jnp.sum(-0.5 * noise ** 2 - log_std, axis=-1, keepdims=True)
              - 0.5 * np.log(2.0 * np.pi) * A)
    mu_t, pi_t = jnp.tanh(mu), jnp.tanh(pi)
    log_pi = log_pi - jnp.sum(jnp.log(jnp.maximum(1.0 - pi_t ** 2, 0.0) + 1e-6),
                              axis=-1, keepdims=True)
    return mu_t, pi_t, log_pi, log_std


if __name__ == "__main__":
    # Shapes consistent with the module:
    #   conv head hard-codes Linear(128, 50) -> obs channels = 128,
    #   encoder_feature_dim = 50 (so trunk input 2*50 = 100).
    C, H, W = 128, 8, 8
    goal_dim = 16
    feat = 50
    hidden_dim = 32
    action_dim = 6
    log_std_min, log_std_max = -10.0, 2.0

    key = jax.random.PRNGKey(0)
    ks = jax.random.split(key, 20)

    def u(k, shape, fan_in):
        bound = 1.0 / np.sqrt(fan_in)
        return jax.random.uniform(k, shape, jnp.float32, -bound, bound)

    # Deterministic synthetic parameters (PyTorch Linear default-style init).
    cw = u(ks[0], (128, feat), 128)            # conv Linear(128, 50)
    cb = u(ks[1], (1, feat), 128)
    ew = u(ks[2], (goal_dim, feat), goal_dim)  # embedding Linear(goal_dim, 50)
    eb = u(ks[3], (1, feat), goal_dim)
    w1 = u(ks[4], (2 * feat, hidden_dim), 2 * feat)   # trunk L1
    w1a, w1b = w1[:feat], w1[feat:]                   # split for concat-free matmul
    b1 = u(ks[5], (1, hidden_dim), 2 * feat)
    w2 = u(ks[6], (hidden_dim, hidden_dim), hidden_dim)
    b2 = u(ks[7], (1, hidden_dim), hidden_dim)
    w3 = u(ks[8], (hidden_dim, 2 * action_dim), hidden_dim)
    b3 = u(ks[9], (1, 2 * action_dim), hidden_dim)
    params = (cw, cb, ew, eb, w1a, w1b, b1, w2, b2, w3, b3)

    def run_case(kobs, kgoal, knoise, B):
        # Producer-side bf16 obs (the intended fast path: no extra cast pass).
        obs = jax.random.normal(kobs, (B, C, H, W), jnp.float32).astype(jnp.bfloat16)
        goal = jax.random.normal(kgoal, (B, goal_dim), jnp.float32)
        # torch.randn_like(mu) noise is generated host-side and fed in.
        # TODO(synk): optionally move noise generation in-kernel via
        # pltpu.prng_seed / pltpu.stateful_normal if bit-exact torch
        # reproducibility is not required (drops one input stream).
        noise = jax.random.normal(knoise, (B, action_dim), jnp.float32)

        outs = actor_forward(obs, goal, noise, params,
                             log_std_min=log_std_min, log_std_max=log_std_max)
        jax.block_until_ready(outs)

        refs = actor_forward_ref(obs.astype(jnp.float32), goal, noise, params,
                                 log_std_min=log_std_min, log_std_max=log_std_max)
        for a, b in zip(outs, refs):
            np.testing.assert_allclose(np.asarray(a), np.asarray(b),
                                       rtol=2e-3, atol=2e-3)

    # Small case (single grid step, TB == B).
    run_case(ks[10], ks[11], ks[12], B=2)
    # Remainder case: B not a multiple of the batch tile -> exercises the
    # masked last block and a multi-step (megacore-shardable) grid.
    run_case(ks[13], ks[14], ks[15], B=20)

    print("KERNEL_OK")
</pallas_src>

<mosaic_0001>
module attributes {stable_mosaic.version = 11 : i64} {
  func.func @actor_kernel(%arg0: i32, %arg1: memref<2x128x64xbf16, #tpu.memory_space<vmem>>, %arg2: memref<2x128xf32, #tpu.memory_space<vmem>>, %arg3: memref<128x50xf32, #tpu.memory_space<vmem>>, %arg4: memref<1x50xf32, #tpu.memory_space<vmem>>, %arg5: memref<16x50xf32, #tpu.memory_space<vmem>>, %arg6: memref<1x50xf32, #tpu.memory_space<vmem>>, %arg7: memref<50x32xf32, #tpu.memory_space<vmem>>, %arg8: memref<50x32xf32, #tpu.memory_space<vmem>>, %arg9: memref<1x32xf32, #tpu.memory_space<vmem>>, %arg10: memref<32x32xf32, #tpu.memory_space<vmem>>, %arg11: memref<1x32xf32, #tpu.memory_space<vmem>>, %arg12: memref<32x6xf32, #tpu.memory_space<vmem>>, %arg13: memref<32x6xf32, #tpu.memory_space<vmem>>, %arg14: memref<1x6xf32, #tpu.memory_space<vmem>>, %arg15: memref<1x6xf32, #tpu.memory_space<vmem>>, %arg16: memref<2x128xf32, #tpu.memory_space<vmem>>) attributes {dimension_semantics = [#tpu.dimension_semantics<parallel>], iteration_bounds = array<i64: 1>, scalar_prefetch = 0 : i64, scratch_operands = 0 : i64, tpu.core_type = #tpu.core_type<tc>, window_params = [{transform_indices = @transform_0, window_bounds = array<i64: 2, 128, 64>}, {transform_indices = @transform_1, window_bounds = array<i64: 2, 128>}, {pipeline_mode = #tpu.pipeline_mode<synchronous>, transform_indices = @transform_2, window_bounds = array<i64: 128, 50>}, {pipeline_mode = #tpu.pipeline_mode<synchronous>, transform_indices = @transform_3, window_bounds = array<i64: 1, 50>}, {pipeline_mode = #tpu.pipeline_mode<synchronous>, transform_indices = @transform_4, window_bounds = array<i64: 16, 50>}, {pipeline_mode = #tpu.pipeline_mode<synchronous>, transform_indices = @transform_5, window_bounds = array<i64: 1, 50>}, {pipeline_mode = #tpu.pipeline_mode<synchronous>, transform_indices = @transform_6, window_bounds = array<i64: 50, 32>}, {pipeline_mode = #tpu.pipeline_mode<synchronous>, transform_indices = @transform_7, window_bounds = array<i64: 50, 32>}, {pipeline_mode = #tpu.pipeline_mode<synchronous>, transform_indices = @transform_8, window_bounds = array<i64: 1, 32>}, {pipeline_mode = #tpu.pipeline_mode<synchronous>, transform_indices = @transform_9, window_bounds = array<i64: 32, 32>}, {pipeline_mode = #tpu.pipeline_mode<synchronous>, transform_indices = @transform_10, window_bounds = array<i64: 1, 32>}, {pipeline_mode = #tpu.pipeline_mode<synchronous>, transform_indices = @transform_11, window_bounds = array<i64: 32, 6>}, {pipeline_mode = #tpu.pipeline_mode<synchronous>, transform_indices = @transform_12, window_bounds = array<i64: 32, 6>}, {pipeline_mode = #tpu.pipeline_mode<synchronous>, transform_indices = @transform_13, window_bounds = array<i64: 1, 6>}, {pipeline_mode = #tpu.pipeline_mode<synchronous>, transform_indices = @transform_14, window_bounds = array<i64: 1, 6>}, {transform_indices = @transform_15, window_bounds = array<i64: 2, 128>}]} {
    %c0 = arith.constant 0 : index
    %c0_0 = arith.constant 0 : index
    %c0_1 = arith.constant 0 : index
    %0 = vector.load %arg1[%c0, %c0_0, %c0_1] : memref<2x128x64xbf16, #tpu.memory_space<vmem>>, vector<2x128x64xbf16>
    %cst = arith.constant dense<0xFF80> : vector<2x128xbf16>
    %1 = vector.multi_reduction <maximumf>, %0, %cst [2] : vector<2x128x64xbf16> to vector<2x128xbf16>
    %2 = arith.extf %1 : vector<2x128xbf16> to vector<2x128xf32>
    %c0_2 = arith.constant 0 : index
    %c0_3 = arith.constant 0 : index
    %3 = vector.load %arg3[%c0_2, %c0_3] : memref<128x50xf32, #tpu.memory_space<vmem>>, vector<128x50xf32>
    %cst_4 = arith.constant dense<0.000000e+00> : vector<2x50xf32>
    %4 = tpu.matmul %2, %3, %cst_4 {dimension_numbers = #tpu.dot_dimension_numbers<[1], [0], [0], [1], [0, 0, 1, 1], [], []>} : vector<2x128xf32>, vector<128x50xf32>, vector<2x50xf32> -> vector<2x50xf32>
    %c0_5 = arith.constant 0 : index
    %c0_6 = arith.constant 0 : index
    %5 = vector.load %arg4[%c0_5, %c0_6] : memref<1x50xf32, #tpu.memory_space<vmem>>, vector<1x50xf32>
    %6 = vector.broadcast %5 : vector<1x50xf32> to vector<2x50xf32>
    %7 = arith.addf %4, %6 : vector<2x50xf32>
    %8 = math.tanh %7 : vector<2x50xf32>
    %c0_7 = arith.constant 0 : index
    %c0_8 = arith.constant 0 : index
    %9 = vector.load %arg2[%c0_7, %c0_8] : memref<2x128xf32, #tpu.memory_space<vmem>>, vector<2x16xf32>
    %c0_9 = arith.constant 0 : index
    %c16 = arith.constant 16 : index
    %10 = vector.load %arg2[%c0_9, %c16] : memref<2x128xf32, #tpu.memory_space<vmem>>, vector<2x6xf32>
    %c0_10 = arith.constant 0 : index
    %c0_11 = arith.constant 0 : index
    %11 = vector.load %arg5[%c0_10, %c0_11] : memref<16x50xf32, #tpu.memory_space<vmem>>, vector<16x50xf32>
    %cst_12 = arith.constant dense<0.000000e+00> : vector<2x50xf32>
    %12 = tpu.matmul %9, %11, %cst_12 {dimension_numbers = #tpu.dot_dimension_numbers<[1], [0], [0], [1], [0, 0, 1, 1], [], []>} : vector<2x16xf32>, vector<16x50xf32>, vector<2x50xf32> -> vector<2x50xf32>
    %c0_13 = arith.constant 0 : index
    %c0_14 = arith.constant 0 : index
    %13 = vector.load %arg6[%c0_13, %c0_14] : memref<1x50xf32, #tpu.memory_space<vmem>>, vector<1x50xf32>
    %14 = vector.broadcast %13 : vector<1x50xf32> to vector<2x50xf32>
    %15 = arith.addf %12, %14 : vector<2x50xf32>
    %c0_15 = arith.constant 0 : index
    %c0_16 = arith.constant 0 : index
    %16 = vector.load %arg7[%c0_15, %c0_16] : memref<50x32xf32, #tpu.memory_space<vmem>>, vector<50x32xf32>
    %cst_17 = arith.constant dense<0.000000e+00> : vector<2x32xf32>
    %17 = tpu.matmul %8, %16, %cst_17 {dimension_numbers = #tpu.dot_dimension_numbers<[1], [0], [0], [1], [0, 0, 1, 1], [], []>} : vector<2x50xf32>, vector<50x32xf32>, vector<2x32xf32> -> vector<2x32xf32>
    %c0_18 = arith.constant 0 : index
    %c0_19 = arith.constant 0 : index
    %18 = vector.load %arg8[%c0_18, %c0_19] : memref<50x32xf32, #tpu.memory_space<vmem>>, vector<50x32xf32>
    %cst_20 = arith.constant dense<0.000000e+00> : vector<2x32xf32>
    %19 = tpu.matmul %15, %18, %cst_20 {dimension_numbers = #tpu.dot_dimension_numbers<[1], [0], [0], [1], [0, 0, 1, 1], [], []>} : vector<2x50xf32>, vector<50x32xf32>, vector<2x32xf32> -> vector<2x32xf32>
    %20 = arith.addf %17, %19 : vector<2x32xf32>
    %c0_21 = arith.constant 0 : index
    %c0_22 = arith.constant 0 : index
    %21 = vector.load %arg9[%c0_21, %c0_22] : memref<1x32xf32, #tpu.memory_space<vmem>>, vector<1x32xf32>
    %22 = vector.broadcast %21 : vector<1x32xf32> to vector<2x32xf32>
    %23 = arith.addf %20, %22 : vector<2x32xf32>
    %cst_23 = arith.constant 0.000000e+00 : f32
    %24 = vector.broadcast %cst_23 : f32 to vector<2x32xf32>
    %25 = arith.maximumf %23, %24 : vector<2x32xf32>
    %c0_24 = arith.constant 0 : index
    %c0_25 = arith.constant 0 : index
    %26 = vector.load %arg10[%c0_24, %c0_25] : memref<32x32xf32, #tpu.memory_space<vmem>>, vector<32x32xf32>
    %cst_26 = arith.constant dense<0.000000e+00> : vector<2x32xf32>
    %27 = tpu.matmul %25, %26, %cst_26 {dimension_numbers = #tpu.dot_dimension_numbers<[1], [0], [0], [1], [0, 0, 1, 1], [], []>} : vector<2x32xf32>, vector<32x32xf32>, vector<2x32xf32> -> vector<2x32xf32>
    %c0_27 = arith.constant 0 : index
    %c0_28 = arith.constant 0 : index
    %28 = vector.load %arg11[%c0_27, %c0_28] : memref<1x32xf32, #tpu.memory_space<vmem>>, vector<1x32xf32>
    %29 = vector.broadcast %28 : vector<1x32xf32> to vector<2x32xf32>
    %30 = arith.addf %27, %29 : vector<2x32xf32>
    %cst_29 = arith.constant 0.000000e+00 : f32
    %31 = vector.broadcast %cst_29 : f32 to vector<2x32xf32>
    %32 = arith.maximumf %30, %31 : vector<2x32xf32>
    %c0_30 = arith.constant 0 : index
    %c0_31 = arith.constant 0 : index
    %33 = vector.load %arg12[%c0_30, %c0_31] : memref<32x6xf32, #tpu.memory_space<vmem>>, vector<32x6xf32>
    %cst_32 = arith.constant dense<0.000000e+00> : vector<2x6xf32>
    %34 = tpu.matmul %32, %33, %cst_32 {dimension_numbers = #tpu.dot_dimension_numbers<[1], [0], [0], [1], [0, 0, 1, 1], [], []>} : vector<2x32xf32>, vector<32x6xf32>, vector<2x6xf32> -> vector<2x6xf32>
    %c0_33 = arith.constant 0 : index
    %c0_34 = arith.constant 0 : index
    %35 = vector.load %arg14[%c0_33, %c0_34] : memref<1x6xf32, #tpu.memory_space<vmem>>, vector<1x6xf32>
    %36 = vector.broadcast %35 : vector<1x6xf32> to vector<2x6xf32>
    %37 = arith.addf %34, %36 : vector<2x6xf32>
    %c0_35 = arith.constant 0 : index
    %c0_36 = arith.constant 0 : index
    %38 = vector.load %arg13[%c0_35, %c0_36] : memref<32x6xf32, #tpu.memory_space<vmem>>, vector<32x6xf32>
    %cst_37 = arith.constant dense<0.000000e+00> : vector<2x6xf32>
    %39 = tpu.matmul %32, %38, %cst_37 {dimension_numbers = #tpu.dot_dimension_numbers<[1], [0], [0], [1], [0, 0, 1, 1], [], []>} : vector<2x32xf32>, vector<32x6xf32>, vector<2x6xf32> -> vector<2x6xf32>
    %c0_38 = arith.constant 0 : index
    %c0_39 = arith.constant 0 : index
    %40 = vector.load %arg15[%c0_38, %c0_39] : memref<1x6xf32, #tpu.memory_space<vmem>>, vector<1x6xf32>
    %41 = vector.broadcast %40 : vector<1x6xf32> to vector<2x6xf32>
    %42 = arith.addf %39, %41 : vector<2x6xf32>
    %43 = math.tanh %42 : vector<2x6xf32>
    %cst_40 = arith.constant 1.000000e+00 : f32
    %44 = vector.broadcast %cst_40 : f32 to vector<2x6xf32>
    %45 = arith.addf %43, %44 : vector<2x6xf32>
    %cst_41 = arith.constant 6.000000e+00 : f32
    %46 = vector.broadcast %cst_41 : f32 to vector<2x6xf32>
    %47 = arith.mulf %46, %45 : vector<2x6xf32>
    %cst_42 = arith.constant -1.000000e+01 : f32
    %48 = vector.broadcast %cst_42 : f32 to vector<2x6xf32>
    %49 = arith.addf %48, %47 : vector<2x6xf32>
    %50 = math.exp %49 : vector<2x6xf32>
    %51 = arith.mulf %10, %50 : vector<2x6xf32>
    %52 = arith.addf %37, %51 : vector<2x6xf32>
    %cst_43 = arith.constant -5.000000e-01 : f32
    %53 = vector.broadcast %cst_43 : f32 to vector<2x6xf32>
    %54 = arith.mulf %53, %10 : vector<2x6xf32>
    %55 = arith.mulf %54, %10 : vector<2x6xf32>
    %56 = arith.subf %55, %49 : vector<2x6xf32>
    %cst_44 = arith.constant dense<0.000000e+00> : vector<2xf32>
    %57 = vector.multi_reduction <add>, %56, %cst_44 [1] : vector<2x6xf32> to vector<2xf32>
    %58 = vector.shape_cast %57 : vector<2xf32> to vector<2x1xf32>
    %cst_45 = arith.constant 5.51363134 : f32
    %59 = vector.broadcast %cst_45 : f32 to vector<2x1xf32>
    %60 = arith.subf %58, %59 : vector<2x1xf32>
    %61 = math.tanh %37 : vector<2x6xf32>
    %62 = math.tanh %52 : vector<2x6xf32>
    %63 = arith.mulf %62, %62 : vector<2x6xf32>
    %cst_46 = arith.constant 1.000000e+00 : f32
    %64 = vector.broadcast %cst_46 : f32 to vector<2x6xf32>
    %65 = arith.subf %64, %63 : vector<2x6xf32>
    %cst_47 = arith.constant 0.000000e+00 : f32
    %66 = vector.broadcast %cst_47 : f32 to vector<2x6xf32>
    %67 = arith.maximumf %65, %66 : vector<2x6xf32>
    %cst_48 = arith.constant 9.99999997E-7 : f32
    %68 = vector.broadcast %cst_48 : f32 to vector<2x6xf32>
    %69 = arith.addf %67, %68 : vector<2x6xf32>
    %70 = math.log %69 : vector<2x6xf32>
    %cst_49 = arith.constant dense<0.000000e+00> : vector<2xf32>
    %71 = vector.multi_reduction <add>, %70, %cst_49 [1] : vector<2x6xf32> to vector<2xf32>
    %72 = vector.shape_cast %71 : vector<2xf32> to vector<2x1xf32>
    %73 = arith.subf %60, %72 : vector<2x1xf32>
    %c0_50 = arith.constant 0 : index
    %c0_51 = arith.constant 0 : index
    %74 = vector.load %arg16[%c0_50, %c0_51] : memref<2x128xf32, #tpu.memory_space<vmem>>, vector<2x6xf32>
    tpu.vector_store %arg16[%c0_50, %c0_51], %61 {strides = array<i32>} : memref<2x128xf32, #tpu.memory_space<vmem>>, vector<2x6xf32>,
    %c0_52 = arith.constant 0 : index
    %c6 = arith.constant 6 : index
    %75 = vector.load %arg16[%c0_52, %c6] : memref<2x128xf32, #tpu.memory_space<vmem>>, vector<2x6xf32>
    tpu.vector_store %arg16[%c0_52, %c6], %62 {strides = array<i32>} : memref<2x128xf32, #tpu.memory_space<vmem>>, vector<2x6xf32>,
    %c0_53 = arith.constant 0 : index
    %c12 = arith.constant 12 : index
    %76 = vector.load %arg16[%c0_53, %c12] : memref<2x128xf32, #tpu.memory_space<vmem>>, vector<2x6xf32>
    tpu.vector_store %arg16[%c0_53, %c12], %49 {strides = array<i32>} : memref<2x128xf32, #tpu.memory_space<vmem>>, vector<2x6xf32>,
    %c0_54 = arith.constant 0 : index
    %c18 = arith.constant 18 : index
    %77 = vector.load %arg16[%c0_54, %c18] : memref<2x128xf32, #tpu.memory_space<vmem>>, vector<2x1xf32>
    tpu.vector_store %arg16[%c0_54, %c18], %73 {strides = array<i32>} : memref<2x128xf32, #tpu.memory_space<vmem>>, vector<2x1xf32>,
    return
  }
  func.func @transform_0(%arg0: i32) -> (i32, i32, i32) {
    %c0_i32 = arith.constant 0 : i32
    %c0_i32_0 = arith.constant 0 : i32
    %c0_i32_1 = arith.constant 0 : i32
    return %arg0, %c0_i32, %c0_i32_0 : i32, i32, i32
  }
  func.func @transform_1(%arg0: i32) -> (i32, i32) {
    %c0_i32 = arith.constant 0 : i32
    %c0_i32_0 = arith.constant 0 : i32
    return %arg0, %c0_i32 : i32, i32
  }
  func.func @transform_2(%arg0: i32) -> (i32, i32) {
    %c0_i32 = arith.constant 0 : i32
    %c0_i32_0 = arith.constant 0 : i32
    %c0_i32_1 = arith.constant 0 : i32
    return %c0_i32, %c0_i32_0 : i32, i32
  }
  func.func @transform_3(%arg0: i32) -> (i32, i32) {
    %c0_i32 = arith.constant 0 : i32
    %c0_i32_0 = arith.constant 0 : i32
    %c0_i32_1 = arith.constant 0 : i32
    return %c0_i32, %c0_i32_0 : i32, i32
  }
  func.func @transform_4(%arg0: i32) -> (i32, i32) {
    %c0_i32 = arith.constant 0 : i32
    %c0_i32_0 = arith.constant 0 : i32
    %c0_i32_1 = arith.constant 0 : i32
    return %c0_i32, %c0_i32_0 : i32, i32
  }
  func.func @transform_5(%arg0: i32) -> (i32, i32) {
    %c0_i32 = arith.constant 0 : i32
    %c0_i32_0 = arith.constant 0 : i32
    %c0_i32_1 = arith.constant 0 : i32
    return %c0_i32, %c0_i32_0 : i32, i32
  }
  func.func @transform_6(%arg0: i32) -> (i32, i32) {
    %c0_i32 = arith.constant 0 : i32
    %c0_i32_0 = arith.constant 0 : i32
    %c0_i32_1 = arith.constant 0 : i32
    return %c0_i32, %c0_i32_0 : i32, i32
  }
  func.func @transform_7(%arg0: i32) -> (i32, i32) {
    %c0_i32 = arith.constant 0 : i32
    %c0_i32_0 = arith.constant 0 : i32
    %c0_i32_1 = arith.constant 0 : i32
    return %c0_i32, %c0_i32_0 : i32, i32
  }
  func.func @transform_8(%arg0: i32) -> (i32, i32) {
    %c0_i32 = arith.constant 0 : i32
    %c0_i32_0 = arith.constant 0 : i32
    %c0_i32_1 = arith.constant 0 : i32
    return %c0_i32, %c0_i32_0 : i32, i32
  }
  func.func @transform_9(%arg0: i32) -> (i32, i32) {
    %c0_i32 = arith.constant 0 : i32
    %c0_i32_0 = arith.constant 0 : i32
    %c0_i32_1 = arith.constant 0 : i32
    return %c0_i32, %c0_i32_0 : i32, i32
  }
  func.func @transform_10(%arg0: i32) -> (i32, i32) {
    %c0_i32 = arith.constant 0 : i32
    %c0_i32_0 = arith.constant 0 : i32
    %c0_i32_1 = arith.constant 0 : i32
    return %c0_i32, %c0_i32_0 : i32, i32
  }
  func.func @transform_11(%arg0: i32) -> (i32, i32) {
    %c0_i32 = arith.constant 0 : i32
    %c0_i32_0 = arith.constant 0 : i32
    %c0_i32_1 = arith.constant 0 : i32
    return %c0_i32, %c0_i32_0 : i32, i32
  }
  func.func @transform_12(%arg0: i32) -> (i32, i32) {
    %c0_i32 = arith.constant 0 : i32
    %c0_i32_0 = arith.constant 0 : i32
    %c0_i32_1 = arith.constant 0 : i32
    return %c0_i32, %c0_i32_0 : i32, i32
  }
  func.func @transform_13(%arg0: i32) -> (i32, i32) {
    %c0_i32 = arith.constant 0 : i32
    %c0_i32_0 = arith.constant 0 : i32
    %c0_i32_1 = arith.constant 0 : i32
    return %c0_i32, %c0_i32_0 : i32, i32
  }
  func.func @transform_14(%arg0: i32) -> (i32, i32) {
    %c0_i32 = arith.constant 0 : i32
    %c0_i32_0 = arith.constant 0 : i32
    %c0_i32_1 = arith.constant 0 : i32
    return %c0_i32, %c0_i32_0 : i32, i32
  }
  func.func @transform_15(%arg0: i32) -> (i32, i32) {
    %c0_i32 = arith.constant 0 : i32
    %c0_i32_0 = arith.constant 0 : i32
    return %arg0, %c0_i32 : i32, i32
  }
}

</mosaic_0001>

<llo_original>
// kernel: tpu_custom_call.1
$region0: #{tpu_custom_call.1}
  #allocation0 [shape = 'u32[]', space=smem, size = 0x4, offset = 0x4, fixed_abs, tag = 'smem constant byte address 0x4 - core index']
  #allocation1 [shape = 'u32[72,128]{1,0:T(1,128)}', space=vmem, size = 0x9000, scoped, tag = 'internal scratch']
  %s0 = inlined_call_operand.vmem [shape: bf16[2,128,64], index: 0, kind: input, shape index: {}]
  %s1 = inlined_call_operand.vmem [shape: f32[2,128], index: 1, kind: input, shape index: {}]
  %s2 = inlined_call_operand.vmem [shape: f32[128,50], index: 2, kind: input, shape index: {}]
  %s3 = inlined_call_operand.vmem [shape: f32[1,50], index: 3, kind: input, shape index: {}]
  %s4 = inlined_call_operand.vmem [shape: f32[16,50], index: 4, kind: input, shape index: {}]
  %s5 = inlined_call_operand.vmem [shape: f32[1,50], index: 5, kind: input, shape index: {}]
  %s6 = inlined_call_operand.vmem [shape: f32[50,32], index: 6, kind: input, shape index: {}]
  %s7 = inlined_call_operand.vmem [shape: f32[50,32], index: 7, kind: input, shape index: {}]
  %s8 = inlined_call_operand.vmem [shape: f32[1,32], index: 8, kind: input, shape index: {}]
  %s9 = inlined_call_operand.vmem [shape: f32[32,32], index: 9, kind: input, shape index: {}]
  %s10 = inlined_call_operand.vmem [shape: f32[1,32], index: 10, kind: input, shape index: {}]
  %s11 = inlined_call_operand.vmem [shape: f32[32,6], index: 11, kind: input, shape index: {}]
  %s12 = inlined_call_operand.vmem [shape: f32[32,6], index: 12, kind: input, shape index: {}]
  %s13 = inlined_call_operand.vmem [shape: f32[1,6], index: 13, kind: input, shape index: {}]
  %s14 = inlined_call_operand.vmem [shape: f32[1,6], index: 14, kind: input, shape index: {}]
  %s15 = inlined_call_operand.hbm [shape: f32[2,128], index: 15, kind: output, shape index: {}]
  %s16 = sld [smem:[#allocation0]]
  $region70: #{tpu_custom_call.1} parent=0
    _
  %s18 = ssub.s32 1, %s16
  %s19 = scalar_select 0, %s18, %s16
  $region1: #{tpu_custom_call.1} parent=0
    #allocation2 [shape = 'u8[1024]{0}', space=vmem, size = 0x400, scoped, tag = 'output window, operand 0, single buffered']
    #allocation3 [shape = 's32[1]{0}', space=sflag, size = 0x4, scoped, tag = 'scoped memory for tpu_custom_call.1']
    %20 = vsyncpa [#allocation3], 0
    // Predicated region
    $region2: #{tpu_custom_call.1} parent=1 // pred_check
      _
    $region3: #{tpu_custom_call.1} parent=1 // pred_check_branch
      %22 = sbr.rel (0) target = $region5
    $region4: #{tpu_custom_call.1} parent=1 // pred_region
      _
    $region5: #{tpu_custom_call.1} parent=1 // pred_fallthru
      _
    // Predicated region
    $region6: #{tpu_custom_call.1} parent=1 // pred_check
      _
    $region7: #{tpu_custom_call.1} parent=1 // pred_check_branch
      %24 = sbr.rel (0) target = $region9
    $region8: #{tpu_custom_call.1} parent=1 // pred_region
      _
    $region9: #{tpu_custom_call.1} parent=1 // pred_fallthru
      _
    // Predicated region
    $region10: #{tpu_custom_call.1} parent=1 // pred_check
      _
    $region11: #{tpu_custom_call.1} parent=1 // pred_check_branch
      %26 = sbr.rel (0) target = $region13
    $region12: #{tpu_custom_call.1} parent=1 // pred_region
      _
    $region13: #{tpu_custom_call.1} parent=1 // pred_fallthru
      _
    // Predicated region
    $region14: #{tpu_custom_call.1} parent=1 // pred_check
      _
    $region15: #{tpu_custom_call.1} parent=1 // pred_check_branch
      %28 = sbr.rel (0) target = $region17
    $region16: #{tpu_custom_call.1} parent=1 // pred_region
      _
    $region17: #{tpu_custom_call.1} parent=1 // pred_fallthru
      _
    // Predicated region
    $region18: #{tpu_custom_call.1} parent=1 // pred_check
      _
    $region19: #{tpu_custom_call.1} parent=1 // pred_check_branch
      %30 = sbr.rel (0) target = $region21
    $region20: #{tpu_custom_call.1} parent=1 // pred_region
      _
    $region21: #{tpu_custom_call.1} parent=1 // pred_fallthru
      _
    // Predicated region
    $region22: #{tpu_custom_call.1} parent=1 // pred_check
      _
    $region23: #{tpu_custom_call.1} parent=1 // pred_check_branch
      %32 = sbr.rel (0) target = $region25
    $region24: #{tpu_custom_call.1} parent=1 // pred_region
      _
    $region25: #{tpu_custom_call.1} parent=1 // pred_fallthru
      _
    // Predicated region
    $region26: #{tpu_custom_call.1} parent=1 // pred_check
      _
    $region27: #{tpu_custom_call.1} parent=1 // pred_check_branch
      %34 = sbr.rel (0) target = $region29
    $region28: #{tpu_custom_call.1} parent=1 // pred_region
      _
    $region29: #{tpu_custom_call.1} parent=1 // pred_fallthru
      _
    // Predicated region
    $region30: #{tpu_custom_call.1} parent=1 // pred_check
      _
    $region31: #{tpu_custom_call.1} parent=1 // pred_check_branch
      %36 = sbr.rel (0) target = $region33
    $region32: #{tpu_custom_call.1} parent=1 // pred_region
      _
    $region33: #{tpu_custom_call.1} parent=1 // pred_fallthru
      _
    // Predicated region
    $region34: #{tpu_custom_call.1} parent=1 // pred_check
      _
    $region35: #{tpu_custom_call.1} parent=1 // pred_check_branch
      %38 = sbr.rel (0) target = $region37
    $region36: #{tpu_custom_call.1} parent=1 // pred_region
      _
    $region37: #{tpu_custom_call.1} parent=1 // pred_fallthru
      _
    // Predicated region
    $region38: #{tpu_custom_call.1} parent=1 // pred_check
      _
    $region39: #{tpu_custom_call.1} parent=1 // pred_check_branch
      %40 = sbr.rel (0) target = $region41
    $region40: #{tpu_custom_call.1} parent=1 // pred_region
      _
    $region41: #{tpu_custom_call.1} parent=1 // pred_fallthru
      _
    // Predicated region
    $region42: #{tpu_custom_call.1} parent=1 // pred_check
      _
    $region43: #{tpu_custom_call.1} parent=1 // pred_check_branch
      %42 = sbr.rel (0) target = $region45
    $region44: #{tpu_custom_call.1} parent=1 // pred_region
      _
    $region45: #{tpu_custom_call.1} parent=1 // pred_fallthru
      _
    // Predicated region
    $region46: #{tpu_custom_call.1} parent=1 // pred_check
      _
    $region47: #{tpu_custom_call.1} parent=1 // pred_check_branch
      %44 = sbr.rel (0) target = $region49
    $region48: #{tpu_custom_call.1} parent=1 // pred_region
      _
    $region49: #{tpu_custom_call.1} parent=1 // pred_fallthru
      _
    // Predicated region
    $region50: #{tpu_custom_call.1} parent=1 // pred_check
      _
    $region51: #{tpu_custom_call.1} parent=1 // pred_check_branch
      %46 = sbr.rel (0) target = $region53
    $region52: #{tpu_custom_call.1} parent=1 // pred_region
      _
    $region53: #{tpu_custom_call.1} parent=1 // pred_fallthru
      _
    // Predicated region
    $region54: #{tpu_custom_call.1} parent=1 // pred_check
      _
    $region55: #{tpu_custom_call.1} parent=1 // pred_check_branch
      %48 = sbr.rel (0) target = $region57
    $region56: #{tpu_custom_call.1} parent=1 // pred_region
      _
    $region57: #{tpu_custom_call.1} parent=1 // pred_fallthru
      _
    // Predicated region
    $region58: #{tpu_custom_call.1} parent=1 // pred_check
      _
    $region59: #{tpu_custom_call.1} parent=1 // pred_check_branch
      %50 = sbr.rel (0) target = $region61
    $region60: #{tpu_custom_call.1} parent=1 // pred_region
      _
    $region61: #{tpu_custom_call.1} parent=1 // pred_fallthru
      _
    %v51 = vld [vmem:[%s0] sm:$0xf]
    %v52 = vld [vmem:[%s0 + $0x4] sm:$0xf]
    %v53 = vld [vmem:[%s0 + $0x8] sm:$0xf]
    %v54 = vld [vmem:[%s0 + $0xc] sm:$0xf]
    %v55 = vld [vmem:[%s0 + $0x10] sm:$0xf]
    %v56 = vld [vmem:[%s0 + $0x14] sm:$0xf]
    %v57 = vld [vmem:[%s0 + $0x18] sm:$0xf]
    %v58 = vld [vmem:[%s0 + $0x1c] sm:$0xf]
    %v59 = vld [vmem:[%s0 + $0x20] sm:$0xf]
    %v60 = vld [vmem:[%s0 + $0x24] sm:$0xf]
    %v61 = vld [vmem:[%s0 + $0x28] sm:$0xf]
    %v62 = vld [vmem:[%s0 + $0x2c] sm:$0xf]
    %v63 = vld [vmem:[%s0 + $0x30] sm:$0xf]
    %v64 = vld [vmem:[%s0 + $0x34] sm:$0xf]
    %v65 = vld [vmem:[%s0 + $0x38] sm:$0xf]
    %v66 = vld [vmem:[%s0 + $0x3c] sm:$0xf]
    %v67 = vld [vmem:[%s0 + $0x40] sm:$0xf]
    %v68 = vld [vmem:[%s0 + $0x44] sm:$0xf]
    %v69 = vld [vmem:[%s0 + $0x48] sm:$0xf]
    %v70 = vld [vmem:[%s0 + $0x4c] sm:$0xf]
    %v71 = vld [vmem:[%s0 + $0x50] sm:$0xf]
    %v72 = vld [vmem:[%s0 + $0x54] sm:$0xf]
    %v73 = vld [vmem:[%s0 + $0x58] sm:$0xf]
    %v74 = vld [vmem:[%s0 + $0x5c] sm:$0xf]
    %v75 = vld [vmem:[%s0 + $0x60] sm:$0xf]
    %v76 = vld [vmem:[%s0 + $0x64] sm:$0xf]
    %v77 = vld [vmem:[%s0 + $0x68] sm:$0xf]
    %v78 = vld [vmem:[%s0 + $0x6c] sm:$0xf]
    %v79 = vld [vmem:[%s0 + $0x70] sm:$0xf]
    %v80 = vld [vmem:[%s0 + $0x74] sm:$0xf]
    %v81 = vld [vmem:[%s0 + $0x78] sm:$0xf]
    %v82 = vld [vmem:[%s0 + $0x7c] sm:$0xf]
    %v83 = vunpack.c.l.bf16 %v51
    %v84 = vunpack.c.l.bf16 %v52
    %v85 = vunpack.c.l.bf16 %v53
    %v86 = vunpack.c.l.bf16 %v54
    %v87 = vunpack.c.l.bf16 %v55
    %v88 = vunpack.c.l.bf16 %v56
    %v89 = vunpack.c.l.bf16 %v57
    %v90 = vunpack.c.l.bf16 %v58
    %v91 = vunpack.c.l.bf16 %v59
    %v92 = vunpack.c.l.bf16 %v60
    %v93 = vunpack.c.l.bf16 %v61
    %v94 = vunpack.c.l.bf16 %v62
    %v95 = vunpack.c.l.bf16 %v63
    %v96 = vunpack.c.l.bf16 %v64
    %v97 = vunpack.c.l.bf16 %v65
    %v98 = vunpack.c.l.bf16 %v66
    %v99 = vunpack.c.l.bf16 %v67
    %v100 = vunpack.c.l.bf16 %v68
    %v101 = vunpack.c.l.bf16 %v69
    %v102 = vunpack.c.l.bf16 %v70
    %v103 = vunpack.c.l.bf16 %v71
    %v104 = vunpack.c.l.bf16 %v72
    %v105 = vunpack.c.l.bf16 %v73
    %v106 = vunpack.c.l.bf16 %v74
    %v107 = vunpack.c.l.bf16 %v75
    %v108 = vunpack.c.l.bf16 %v76
    %v109 = vunpack.c.l.bf16 %v77
    %v110 = vunpack.c.l.bf16 %v78
    %v111 = vunpack.c.l.bf16 %v79
    %v112 = vunpack.c.l.bf16 %v80
    %v113 = vunpack.c.l.bf16 %v81
    %v114 = vunpack.c.l.bf16 %v82
    %vm115 = vcmask 523264
    %v116 = vsel %vm115, %v83, -inf
    %117 = vmax.xlane.f32.xlu0 %v116
    %v118 = vpop.xlane.xlu0 %117
    %v119 = vsel %vm115, %v84, -inf
    %120 = vmax.xlane.f32.xlu0 %v119
    %v121 = vpop.xlane.xlu0 %120
    %v122 = vsel %vm115, %v85, -inf
    %123 = vmax.xlane.f32.xlu0 %v122
    %v124 = vpop.xlane.xlu0 %123
    %v125 = vsel %vm115, %v86, -inf
    %126 = vmax.xlane.f32.xlu0 %v125
    %v127 = vpop.xlane.xlu0 %126
    %v128 = vsel %vm115, %v87, -inf
    %129 = vmax.xlane.f32.xlu0 %v128
    %v130 = vpop.xlane.xlu0 %129
    %v131 = vsel %vm115, %v88, -inf
    %132 = vmax.xlane.f32.xlu0 %v131
    %v133 = vpop.xlane.xlu0 %132
    %v134 = vsel %vm115, %v89, -inf
    %135 = vmax.xlane.f32.xlu0 %v134
    %v136 = vpop.xlane.xlu0 %135
    %v137 = vsel %vm115, %v90, -inf
    %138 = vmax.xlane.f32.xlu0 %v137
    %v139 = vpop.xlane.xlu0 %138
    %v140 = vsel %vm115, %v91, -inf
    %141 = vmax.xlane.f32.xlu0 %v140
    %v142 = vpop.xlane.xlu0 %141
    %v143 = vsel %vm115, %v92, -inf
    %144 = vmax.xlane.f32.xlu0 %v143
    %v145 = vpop.xlane.xlu0 %144
    %v146 = vsel %vm115, %v93, -inf
    %147 = vmax.xlane.f32.xlu0 %v146
    %v148 = vpop.xlane.xlu0 %147
    %v149 = vsel %vm115, %v94, -inf
    %150 = vmax.xlane.f32.xlu0 %v149
    %v151 = vpop.xlane.xlu0 %150
    %v152 = vsel %vm115, %v95, -inf
    %153 = vmax.xlane.f32.xlu0 %v152
    %v154 = vpop.xlane.xlu0 %153
    %v155 = vsel %vm115, %v96, -inf
    %156 = vmax.xlane.f32.xlu0 %v155
    %v157 = vpop.xlane.xlu0 %156
    %v158 = vsel %vm115, %v97, -inf
    %159 = vmax.xlane.f32.xlu0 %v158
    %v160 = vpop.xlane.xlu0 %159
    %v161 = vsel %vm115, %v98, -inf
    %162 = vmax.xlane.f32.xlu0 %v161
    %v163 = vpop.xlane.xlu0 %162
    %v164 = vsel %vm115, %v99, -inf
    %165 = vmax.xlane.f32.xlu0 %v164
    %v166 = vpop.xlane.xlu0 %165
    %v167 = vsel %vm115, %v100, -inf
    %168 = vmax.xlane.f32.xlu0 %v167
    %v169 = vpop.xlane.xlu0 %168
    %v170 = vsel %vm115, %v101, -inf
    %171 = vmax.xlane.f32.xlu0 %v170
    %v172 = vpop.xlane.xlu0 %171
    %v173 = vsel %vm115, %v102, -inf
    %174 = vmax.xlane.f32.xlu0 %v173
    %v175 = vpop.xlane.xlu0 %174
    %v176 = vsel %vm115, %v103, -inf
    %177 = vmax.xlane.f32.xlu0 %v176
    %v178 = vpop.xlane.xlu0 %177
    %v179 = vsel %vm115, %v104, -inf
    %180 = vmax.xlane.f32.xlu0 %v179
    %v181 = vpop.xlane.xlu0 %180
    %v182 = vsel %vm115, %v105, -inf
    %183 = vmax.xlane.f32.xlu0 %v182
    %v184 = vpop.xlane.xlu0 %183
    %v185 = vsel %vm115, %v106, -inf
    %186 = vmax.xlane.f32.xlu0 %v185
    %v187 = vpop.xlane.xlu0 %186
    %v188 = vsel %vm115, %v107, -inf
    %189 = vmax.xlane.f32.xlu0 %v188
    %v190 = vpop.xlane.xlu0 %189
    %v191 = vsel %vm115, %v108, -inf
    %192 = vmax.xlane.f32.xlu0 %v191
    %v193 = vpop.xlane.xlu0 %192
    %v194 = vsel %vm115, %v109, -inf
    %195 = vmax.xlane.f32.xlu0 %v194
    %v196 = vpop.xlane.xlu0 %195
    %v197 = vsel %vm115, %v110, -inf
    %198 = vmax.xlane.f32.xlu0 %v197
    %v199 = vpop.xlane.xlu0 %198
    %v200 = vsel %vm115, %v111, -inf
    %201 = vmax.xlane.f32.xlu0 %v200
    %v202 = vpop.xlane.xlu0 %201
    %v203 = vsel %vm115, %v112, -inf
    %204 = vmax.xlane.f32.xlu0 %v203
    %v205 = vpop.xlane.xlu0 %204
    %v206 = vsel %vm115, %v113, -inf
    %207 = vmax.xlane.f32.xlu0 %v206
    %v208 = vpop.xlane.xlu0 %207
    %v209 = vsel %vm115, %v114, -inf
    %210 = vmax.xlane.f32.xlu0 %v209
    %v211 = vpop.xlane.xlu0 %210
    %v212 = vpack.c.bf16 %v121, %v118
    %v213 = vpack.c.bf16 %v127, %v124
    %v214 = vpack.c.bf16 %v133, %v130
    %v215 = vpack.c.bf16 %v139, %v136
    %v216 = vpack.c.bf16 %v145, %v142
    %v217 = vpack.c.bf16 %v151, %v148
    %v218 = vpack.c.bf16 %v157, %v154
    %v219 = vpack.c.bf16 %v163, %v160
    %v220 = vpack.c.bf16 %v169, %v166
    %v221 = vpack.c.bf16 %v175, %v172
    %v222 = vpack.c.bf16 %v181, %v178
    %v223 = vpack.c.bf16 %v187, %v184
    %v224 = vpack.c.bf16 %v193, %v190
    %v225 = vpack.c.bf16 %v199, %v196
    %v226 = vpack.c.bf16 %v205, %v202
    %v227 = vpack.c.bf16 %v211, %v208
    %v228 = vunpack.c.l.bf16 %v212
    %v229 = vunpack.c.h.bf16 %v212
    %v230 = vunpack.c.l.bf16 %v213
    %v231 = vunpack.c.h.bf16 %v213
    %v232 = vunpack.c.l.bf16 %v214
    %v233 = vunpack.c.h.bf16 %v214
    %v234 = vunpack.c.l.bf16 %v215
    %v235 = vunpack.c.h.bf16 %v215
    %v236 = vunpack.c.l.bf16 %v216
    %v237 = vunpack.c.h.bf16 %v216
    %v238 = vunpack.c.l.bf16 %v217
    %v239 = vunpack.c.h.bf16 %v217
    %v240 = vunpack.c.l.bf16 %v218
    %v241 = vunpack.c.h.bf16 %v218
    %v242 = vunpack.c.l.bf16 %v219
    %v243 = vunpack.c.h.bf16 %v219
    %v244 = vunpack.c.l.bf16 %v220
    %v245 = vunpack.c.h.bf16 %v220
    %v246 = vunpack.c.l.bf16 %v221
    %v247 = vunpack.c.h.bf16 %v221
    %v248 = vunpack.c.l.bf16 %v222
    %v249 = vunpack.c.h.bf16 %v222
    %v250 = vunpack.c.l.bf16 %v223
    %v251 = vunpack.c.h.bf16 %v223
    %v252 = vunpack.c.l.bf16 %v224
    %v253 = vunpack.c.h.bf16 %v224
    %v254 = vunpack.c.l.bf16 %v225
    %v255 = vunpack.c.h.bf16 %v225
    %v256 = vunpack.c.l.bf16 %v226
    %v257 = vunpack.c.h.bf16 %v226
    %v258 = vunpack.c.l.bf16 %v227
    %v259 = vunpack.c.h.bf16 %v227
    %v260 = vld [vmem:[%s2] sm:$0xff]
    %v261 = vld [vmem:[%s2 + $0x8] sm:$0xff]
    %v262 = vld [vmem:[%s2 + $0x10] sm:$0xff]
    %v263 = vld [vmem:[%s2 + $0x18] sm:$0xff]
    %v264 = vld [vmem:[%s2 + $0x20] sm:$0xff]
    %v265 = vld [vmem:[%s2 + $0x28] sm:$0xff]
    %v266 = vld [vmem:[%s2 + $0x30] sm:$0xff]
    %v267 = vld [vmem:[%s2 + $0x38] sm:$0xff]
    %v268 = vld [vmem:[%s2 + $0x40] sm:$0xff]
    %v269 = vld [vmem:[%s2 + $0x48] sm:$0xff]
    %v270 = vld [vmem:[%s2 + $0x50] sm:$0xff]
    %v271 = vld [vmem:[%s2 + $0x58] sm:$0xff]
    %v272 = vld [vmem:[%s2 + $0x60] sm:$0xff]
    %v273 = vld [vmem:[%s2 + $0x68] sm:$0xff]
    %v274 = vld [vmem:[%s2 + $0x70] sm:$0xff]
    %v275 = vld [vmem:[%s2 + $0x78] sm:$0xff]
    %v276 = vld [vmem:[%s3] sm:$0x1]
    %v278 = vperm.slane %v276, 0
    %v312 = vlaneseq
    %v313 = vand.u32 %v312, 127
    %v314 = vperm.slane %v228, %v313
    %v315 = vadd.s32 %v313, 4294967288
    %v316 = vperm.slane %v229, %v315
    %vm317 = vcmask 130112
    %v318 = vsel %vm317, %v316, %v314
    %v319 = vadd.s32 %v313, 4294967280
    %v320 = vperm.slane %v230, %v319
    %vm321 = vcmask 195712
    %v322 = vsel %vm321, %v320, %v318
    %v323 = vadd.s32 %v313, 4294967272
    %v324 = vperm.slane %v231, %v323
    %vm325 = vcmask 261312
    %v326 = vsel %vm325, %v324, %v322
    %v327 = vadd.s32 %v313, 4294967264
    %v328 = vperm.slane %v232, %v327
    %vm329 = vcmask 326912
    %v330 = vsel %vm329, %v328, %v326
    %v331 = vadd.s32 %v313, 4294967256
    %v332 = vperm.slane %v233, %v331
    %vm333 = vcmask 392512
    %v334 = vsel %vm333, %v332, %v330
    %v335 = vadd.s32 %v313, 4294967248
    %v336 = vperm.slane %v234, %v335
    %vm337 = vcmask 458112
    %v338 = vsel %vm337, %v336, %v334
    %v339 = vadd.s32 %v313, 4294967240
    %v340 = vperm.slane %v235, %v339
    %vm341 = vcmask 523712
    %v342 = vsel %vm341, %v340, %v338
    %v343 = vadd.s32 %v313, 4294967232
    %v344 = vperm.slane %v236, %v343
    %vm345 = vcmask 589312
    %v346 = vsel %vm345, %v344, %v342
    %v347 = vadd.s32 %v313, 4294967224
    %v348 = vperm.slane %v237, %v347
    %vm349 = vcmask 654912
    %v350 = vsel %vm349, %v348, %v346
    %v351 = vadd.s32 %v313, 4294967216
    %v352 = vperm.slane %v238, %v351
    %vm353 = vcmask 720512
    %v354 = vsel %vm353, %v352, %v350
    %v355 = vadd.s32 %v313, 4294967208
    %v356 = vperm.slane %v239, %v355
    %vm357 = vcmask 786112
    %v358 = vsel %vm357, %v356, %v354
    %v359 = vadd.s32 %v313, 4294967200
    %v360 = vperm.slane %v240, %v359
    %vm361 = vcmask 851712
    %v362 = vsel %vm361, %v360, %v358
    %v363 = vadd.s32 %v313, 4294967192
    %v364 = vperm.slane %v241, %v363
    %vm365 = vcmask 917312
    %v366 = vsel %vm365, %v364, %v362
    %v367 = vadd.s32 %v313, 4294967184
    %v368 = vperm.slane %v242, %v367
    %vm369 = vcmask 982912
    %v370 = vsel %vm369, %v368, %v366
    %v371 = vadd.s32 %v313, 4294967176
    %v372 = vperm.slane %v243, %v371
    %vm373 = vcmask 1048512
    %v374 = vsel %vm373, %v372, %v370
    %v375 = vperm.slane %v244, %v313
    %v376 = vperm.slane %v245, %v315
    %v377 = vsel %vm317, %v376, %v375
    %v378 = vperm.slane %v246, %v319
    %v379 = vsel %vm321, %v378, %v377
    %v380 = vperm.slane %v247, %v323
    %v381 = vsel %vm325, %v380, %v379
    %v382 = vperm.slane %v248, %v327
    %v383 = vsel %vm329, %v382, %v381
    %v384 = vperm.slane %v249, %v331
    %v385 = vsel %vm333, %v384, %v383
    %v386 = vperm.slane %v250, %v335
    %v387 = vsel %vm337, %v386, %v385
    %v388 = vperm.slane %v251, %v339
    %v389 = vsel %vm341, %v388, %v387
    %v390 = vperm.slane %v252, %v343
    %v391 = vsel %vm345, %v390, %v389
    %v392 = vperm.slane %v253, %v347
    %v393 = vsel %vm349, %v392, %v391
    %v394 = vperm.slane %v254, %v351
    %v395 = vsel %vm353, %v394, %v393
    %v396 = vperm.slane %v255, %v355
    %v397 = vsel %vm357, %v396, %v395
    %v398 = vperm.slane %v256, %v359
    %v399 = vsel %vm361, %v398, %v397
    %v400 = vperm.slane %v257, %v363
    %v401 = vsel %vm365, %v400, %v399
    %v402 = vperm.slane %v258, %v367
    %v403 = vsel %vm369, %v402, %v401
    %v404 = vperm.slane %v259, %v371
    %v405 = vsel %vm373, %v404, %v403
    %vm406 = vcmask 1041409
    %v407 = vsel %vm406, %v405, %v374
    %409 = vmatpush.msra.mxu0 %v275
    %410 = vmatpush.msra.mxu0 %v274
    %411 = vmatpush.msra.mxu0 %v273
    %412 = vmatpush.msra.mxu0 %v272
    %413 = vmatpush.msra.mxu0 %v271
    %414 = vmatpush.msra.mxu0 %v270
    %415 = vmatpush.msra.mxu0 %v269
    %416 = vmatpush.msra.mxu0 %v268
    %417 = vmatpush.msra.mxu0 %v267
    %418 = vmatpush.msra.mxu0 %v266
    %419 = vmatpush.msra.mxu0 %v265
    %420 = vmatpush.msra.mxu0 %v264
    %421 = vmatpush.msra.mxu0 %v263
    %422 = vmatpush.msra.mxu0 %v262
    %423 = vmatpush.msra.mxu0 %v261
    %424 = vmatpush.msra.mxu0 %v260
    %425 = vmatmul.f32.gmra.mxu0 %v407
    %v426 = vpop.f32.mrf.mxu0
    %v427 = vadd.f32 %v278, %v426
    %428 = vdwg.mxu0
    %v429 = vtanh.pop %v427
    %v430 = vld [vmem:[%s1] sm:$0x3]
    %v431 = vld [vmem:[%s4] sm:$0xff]
    %v432 = vld [vmem:[%s4 + $0x8] sm:$0xff]
    %v433 = vld [vmem:[%s5] sm:$0x1]
    %v435 = vperm.slane %v433, 0
    %vm437 = vcmask 130048
    %v439 = vsel %vm437, %v430, 0
    %441 = vmatpush.msra.mxu0 0.0
    %442 = vmatpush.msra.mxu0 0.0
    %443 = vmatpush.msra.mxu0 0.0
    %444 = vmatpush.msra.mxu0 0.0
    %445 = vmatpush.msra.mxu0 0.0
    %446 = vmatpush.msra.mxu0 0.0
    %447 = vmatpush.msra.mxu0 0.0
    %448 = vmatpush.msra.mxu0 0.0
    %449 = vmatpush.msra.mxu0 0.0
    %450 = vmatpush.msra.mxu0 0.0
    %451 = vmatpush.msra.mxu0 0.0
    %452 = vmatpush.msra.mxu0 0.0
    %453 = vmatpush.msra.mxu0 0.0
    %454 = vmatpush.msra.mxu0 0.0
    %455 = vmatpush.msra.mxu0 %v432
    %456 = vmatpush.msra.mxu0 %v431
    %457 = vmatmul.f32.gmra.mxu0 %v439
    %v458 = vpop.f32.mrf.mxu0
    %v459 = vadd.f32 %v435, %v458
    %460 = vdwg.mxu0
    %v461 = vld [vmem:[%s6] sm:$0xff]
    %v462 = vld [vmem:[%s6 + $0x8] sm:$0xff]
    %v463 = vld [vmem:[%s6 + $0x10] sm:$0xff]
    %v464 = vld [vmem:[%s6 + $0x18] sm:$0xff]
    %v465 = vld [vmem:[%s6 + $0x20] sm:$0xff]
    %v466 = vld [vmem:[%s6 + $0x28] sm:$0xff]
    %v467 = vld [vmem:[%s6 + $0x30] sm:$0x3]
    %v468 = vld [vmem:[%s7] sm:$0xff]
    %v469 = vld [vmem:[%s7 + $0x8] sm:$0xff]
    %v470 = vld [vmem:[%s7 + $0x10] sm:$0xff]
    %v471 = vld [vmem:[%s7 + $0x18] sm:$0xff]
    %v472 = vld [vmem:[%s7 + $0x20] sm:$0xff]
    %v473 = vld [vmem:[%s7 + $0x28] sm:$0xff]
    %v474 = vld [vmem:[%s7 + $0x30] sm:$0x3]
    %vm475 = vcmask 408576
    %v477 = vsel %vm475, %v459, 0
    %vm479 = vcmask 1041408
    %v481 = vsel %vm479, %v474, 0
    %483 = vmatpush.msra.mxu0 0.0
    %484 = vmatpush.msra.mxu0 0.0
    %485 = vmatpush.msra.mxu0 0.0
    %486 = vmatpush.msra.mxu0 0.0
    %487 = vmatpush.msra.mxu0 0.0
    %488 = vmatpush.msra.mxu0 0.0
    %489 = vmatpush.msra.mxu0 0.0
    %490 = vmatpush.msra.mxu0 0.0
    %491 = vmatpush.msra.mxu0 0.0
    %492 = vmatpush.msra.mxu0 %v481
    %493 = vmatpush.msra.mxu0 %v473
    %494 = vmatpush.msra.mxu0 %v472
    %495 = vmatpush.msra.mxu0 %v471
    %496 = vmatpush.msra.mxu0 %v470
    %497 = vmatpush.msra.mxu0 %v469
    %498 = vmatpush.msra.mxu0 %v468
    %499 = vmatmul.f32.gmra.mxu0 %v477
    %v500 = vpop.f32.mrf.mxu0
    %v501 = vadd.f32 0.0, %v500
    %502 = vdwg.mxu0
    %v504 = vsel %vm475, %v429, 0
    %v507 = vsel %vm479, %v467, 0
    %509 = vmatpush.msra.mxu0 0.0
    %510 = vmatpush.msra.mxu0 0.0
    %511 = vmatpush.msra.mxu0 0.0
    %512 = vmatpush.msra.mxu0 0.0
    %513 = vmatpush.msra.mxu0 0.0
    %514 = vmatpush.msra.mxu0 0.0
    %515 = vmatpush.msra.mxu0 0.0
    %516 = vmatpush.msra.mxu0 0.0
    %517 = vmatpush.msra.mxu0 0.0
    %518 = vmatpush.msra.mxu0 %v507
    %519 = vmatpush.msra.mxu0 %v466
    %520 = vmatpush.msra.mxu0 %v465
    %521 = vmatpush.msra.mxu0 %v464
    %522 = vmatpush.msra.mxu0 %v463
    %523 = vmatpush.msra.mxu0 %v462
    %524 = vmatpush.msra.mxu0 %v461
    %525 = vmatmul.f32.gmra.mxu0 %v504
    %v526 = vpop.f32.mrf.mxu0
    %v527 = vadd.f32 %v501, %v526
    %528 = vdwg.mxu0
    %v529 = vld [vmem:[%s8] sm:$0x1]
    %v531 = vperm.slane %v529, 0
    %v533 = vadd.f32 %v527, %v531
    %v534 = vmax.f32 %v533, 0.0
    %v535 = vld [vmem:[%s9] sm:$0xff]
    %v536 = vld [vmem:[%s9 + $0x8] sm:$0xff]
    %v537 = vld [vmem:[%s9 + $0x10] sm:$0xff]
    %v538 = vld [vmem:[%s9 + $0x18] sm:$0xff]
    %v539 = vld [vmem:[%s10] sm:$0x1]
    %v541 = vperm.slane %v539, 0
    %vm543 = vcmask 261120
    %v545 = vsel %vm543, %v534, 0
    %547 = vmatpush.msra.mxu0 0.0
    %548 = vmatpush.msra.mxu0 0.0
    %549 = vmatpush.msra.mxu0 0.0
    %550 = vmatpush.msra.mxu0 0.0
    %551 = vmatpush.msra.mxu0 0.0
    %552 = vmatpush.msra.mxu0 0.0
    %553 = vmatpush.msra.mxu0 0.0
    %554 = vmatpush.msra.mxu0 0.0
    %555 = vmatpush.msra.mxu0 0.0
    %556 = vmatpush.msra.mxu0 0.0
    %557 = vmatpush.msra.mxu0 0.0
    %558 = vmatpush.msra.mxu0 0.0
    %559 = vmatpush.msra.mxu0 %v538
    %560 = vmatpush.msra.mxu0 %v537
    %561 = vmatpush.msra.mxu0 %v536
    %562 = vmatpush.msra.mxu0 %v535
    %563 = vmatmul.f32.gmra.mxu0 %v545
    %v564 = vpop.f32.mrf.mxu0
    %v565 = vadd.f32 %v541, %v564
    %566 = vdwg.mxu0
    %v567 = vmax.f32 %v565, 0.0
    %v568 = vld [vmem:[%s11] sm:$0xff]
    %v569 = vld [vmem:[%s11 + $0x8] sm:$0xff]
    %v570 = vld [vmem:[%s11 + $0x10] sm:$0xff]
    %v571 = vld [vmem:[%s11 + $0x18] sm:$0xff]
    %v572 = vld [vmem:[%s13] sm:$0x1]
    %v574 = vperm.slane %v572, 0
    %v577 = vsel %vm543, %v567, 0
    %579 = vmatpush.msra.mxu0 0.0
    %580 = vmatpush.msra.mxu0 0.0
    %581 = vmatpush.msra.mxu0 0.0
    %582 = vmatpush.msra.mxu0 0.0
    %583 = vmatpush.msra.mxu0 0.0
    %584 = vmatpush.msra.mxu0 0.0
    %585 = vmatpush.msra.mxu0 0.0
    %586 = vmatpush.msra.mxu0 0.0
    %587 = vmatpush.msra.mxu0 0.0
    %588 = vmatpush.msra.mxu0 0.0
    %589 = vmatpush.msra.mxu0 0.0
    %590 = vmatpush.msra.mxu0 0.0
    %591 = vmatpush.msra.mxu0 %v571
    %592 = vmatpush.msra.mxu0 %v570
    %593 = vmatpush.msra.mxu0 %v569
    %594 = vmatpush.msra.mxu0 %v568
    %595 = vmatmul.f32.gmra.mxu0 %v577
    %v596 = vpop.f32.mrf.mxu0
    %v597 = vadd.f32 %v574, %v596
    %598 = vdwg.mxu0
    %v599 = vld [vmem:[%s12] sm:$0xff]
    %v600 = vld [vmem:[%s12 + $0x8] sm:$0xff]
    %v601 = vld [vmem:[%s12 + $0x10] sm:$0xff]
    %v602 = vld [vmem:[%s12 + $0x18] sm:$0xff]
    %v603 = vld [vmem:[%s14] sm:$0x1]
    %v605 = vperm.slane %v603, 0
    %607 = vmatpush.msra.mxu0 0.0
    %608 = vmatpush.msra.mxu0 0.0
    %609 = vmatpush.msra.mxu0 0.0
    %610 = vmatpush.msra.mxu0 0.0
    %611 = vmatpush.msra.mxu0 0.0
    %612 = vmatpush.msra.mxu0 0.0
    %613 = vmatpush.msra.mxu0 0.0
    %614 = vmatpush.msra.mxu0 0.0
    %615 = vmatpush.msra.mxu0 0.0
    %616 = vmatpush.msra.mxu0 0.0
    %617 = vmatpush.msra.mxu0 0.0
    %618 = vmatpush.msra.mxu0 0.0
    %619 = vmatpush.msra.mxu0 %v602
    %620 = vmatpush.msra.mxu0 %v601
    %621 = vmatpush.msra.mxu0 %v600
    %622 = vmatpush.msra.mxu0 %v599
    %623 = vmatmul.f32.gmra.mxu0 %v577
    %v624 = vpop.f32.mrf.mxu0
    %v625 = vadd.f32 %v605, %v624
    %626 = vdwg.mxu0
    %v627 = vtanh.pop %v625
    %v628 = vadd.f32 %v627, 1.0
    %v629 = vmul.f32 %v628, 6.0
    %v630 = vadd.f32 %v629, -10.0
    %v631 = vmul.f32 %v630, 1.442695
    %v632 = vpow.pop %v631
    %634 = vrot.lane.b32.xlu0 %v632, 16
    %v635 = vpop.permute.xlu0 %634
    %v637 = vmul.f32 %v430, %v635
    %639 = vrot.lane.b32.xlu0 %v637, 112
    %v640 = vpop.permute.xlu0 %639
    %v642 = vadd.f32 %v597, %v640
    %v643 = vmul.f32 %v430, -0.5
    %v644 = vmul.f32 %v643, %v430
    %646 = vrot.lane.b32.xlu0 %v630, 16
    %v647 = vpop.permute.xlu0 %646
    %v649 = vsub.f32 %v644, %v647
    %651 = vrot.lane.b32.xlu0 %v649, 112
    %v652 = vpop.permute.xlu0 %651
    %vm654 = vcmask 41984
    %v655 = vsel %vm654, %v652, 0.0
    %656 = vadd.xlane.f32.xlu0 %v655
    %v657 = vpop.xlane.xlu0 %656
    %v658 = vsub.f32 %v657, 5.5136313
    %v659 = vtanh.pop %v597
    %v660 = vtanh.pop %v642
    %v661 = vmul.f32 %v660, %v660
    %v662 = vsub.f32 1.0, %v661
    %v663 = vmax.f32 %v662, 0.0
    %v664 = vadd.f32 %v663, 1e-06
    %v665 = vlog2.pop %v664
    %v666 = vmul.f32 %v665, 0.6931472
    %v667 = vsel %vm654, %v666, 0.0
    %668 = vadd.xlane.f32.xlu0 %v667
    %v669 = vpop.xlane.xlu0 %668
    %v670 = vsub.f32 %v658, %v669
    %671 = vst.msk [vmem:[#allocation2] sm:$0x3] %vm654, %v659
    %673 = vrot.lane.b32.xlu0 %v660, 6
    %v674 = vpop.permute.xlu0 %673
    %vm676 = vcmask 91184
    %677 = vst.msk [vmem:[#allocation2] sm:$0x3] %vm676, %v674
    %678 = vrot.lane.b32.xlu0 %v630, 12
    %v679 = vpop.permute.xlu0 %678
    %vm681 = vcmask 140384
    %682 = vst.msk [vmem:[#allocation2] sm:$0x3] %vm681, %v679
    %vm683 = vcmask 148624
    %684 = vst.msk [vmem:[#allocation2] sm:$0x3] %vm683, %v670
    // Predicated region
    $region62: #{tpu_custom_call.1} parent=1 // pred_check
      _
    $region63: #{tpu_custom_call.1} parent=1 // pred_check_branch
      %686 = sbr.rel (0) target = $region65
    $region64: #{tpu_custom_call.1} parent=1 // pred_region
      %688 = vsyncadd [#allocation3], 0
      %s690 = sshll.u32 [#allocation2], 4
      %s691 = int_to_ptr.vmem [resolvable:$true] %s690
      %s692 = sshll.u32 %s15, 4
      %s693 = int_to_ptr.hbm [resolvable:$true] %s692
      %695 = dma.vmem_to_hbm [thread:$0]  %s691, 32, %s693, [#allocation3]
    $region65: #{tpu_custom_call.1} parent=1 // pred_fallthru
      _
    // Predicated region
    $region66: #{tpu_custom_call.1} parent=1 // pred_check
      _
    $region67: #{tpu_custom_call.1} parent=1 // pred_check_branch
      %697 = sbr.rel (0) target = $region69
    $region68: #{tpu_custom_call.1} parent=1 // pred_region
      %699 = dma.done [#allocation3], 32
    $region69: #{tpu_custom_call.1} parent=1 // pred_fallthru
      _
    %700 = vsyncpa [#allocation3], 1

</llo_original>
